<compile_context>
chip_gen: v7x
topology: tpu7x:2x2x1
jax: 0.10.0
libtpu: 0.0.40
codegen_flags: <defaults>
</compile_context>

<pallas_src>
import jax
import jax.numpy as jnp
from jax.experimental import pallas as pl
from jax.experimental.pallas import tpu as pltpu

HIDDEN = 128
N_X = 2
DT = 0.01


def _mech_kernel(c_ref,                      # SMEM scalar-prefetch: [c1, c0]
                 x_ref, u_ref,               # (TB, n_x), (TB, 1)
                 w1k_ref, b1k_ref,           # (n_x, 2H), (1, 2H)
                 w2k_ref, b2k_ref,           # (2H, H),  (1, H)
                 winv_row_ref,               # (1, H)  == winv^T / dt
                 dx_ref):                    # (TB, n_x)
    x = x_ref[...]                           # (TB, 2)
    u = u_ref[...]                           # (TB, 1)
    w1k = w1k_ref[...]                       # (2, 2H)

    # phi_k first linear: K=2 contraction as VPU broadcast FMAs (no MXU).
    h_k = (x[:, 0:1] * w1k[0:1, :]
           + x[:, 1:2] * w1k[1:2, :]
           + b1k_ref[...])                                   # (TB, 2H)
    h_k = jnp.where(h_k >= 0.0, h_k, 3.0 * h_k)              # LeakyReLU(slope=3)

    # The single real MXU matmul: (TB, 2H) @ (2H, H).
    out_k = jnp.dot(h_k, w2k_ref[...],
                    preferred_element_type=jnp.float32) + b2k_ref[...]
    out_k = jnp.maximum(out_k, 0.0)                          # ReLU

    # inv_phi (N=1) as VPU multiply + lane reduction; 1/dt folded into winv_row.
    # phi_b branch folded into scalars c1 (u coefficient) and c0 (constant).
    dv = jnp.sum(out_k * winv_row_ref[...], axis=-1, keepdims=True)   # (TB, 1)
    dv = dv + u * c_ref[0] + c_ref[1]

    # dx = concat([x1[..., [1]], dv], -1): assemble the (TB, 2) tile in
    # registers via a lane select, then one store (avoids two masked vst).
    lane = jax.lax.broadcasted_iota(jnp.int32, dx_ref.shape, 1)
    dx_ref[...] = jnp.where(lane == 0, x[:, 1:2], dv)


def prepare_params(params, *, dt=DT):
    """One-time algebraic folding of the linear phi_b branch, inv_phi and 1/dt.

    Must be re-run if dt or any phi_b / inv_phi parameter changes."""
    (w1k, b1k, w2k, b2k, w1b, b1b, w2b, b2b, winv, binv) = params
    winv_row = (winv / dt).reshape(1, HIDDEN)                      # (1, H)
    c1 = ((w1b @ w2b @ winv) / dt).reshape(1)                      # u coefficient
    c0 = (((b1b @ w2b + b2b) @ winv + binv) / dt).reshape(1)       # constant
    c = jnp.concatenate([c1, c0]).astype(jnp.float32)              # (2,)
    return (w1k, b1k, w2k, b2k, winv_row, c)


def mechanical_system_forward(x1, u1, prepared_params, *, block_b=512):
    B = x1.shape[0]
    (w1k, b1k, w2k, b2k, winv_row, c) = prepared_params
    H2 = 2 * HIDDEN

    # Batch tile: multiple of 8 (sublane) unless it equals the full batch.
    tb = min(block_b, B)
    if tb != B:
        tb = max(8, (tb // 8) * 8)
    grid = (pl.cdiv(B, tb),)

    cost = pl.CostEstimate(
        flops=2 * B * H2 * HIDDEN + 8 * B * H2,
        transcendentals=0,
        bytes_accessed=4 * (B * (N_X + 1 + N_X)           # x1, u1, dx
                            + N_X * H2 + H2               # w1k, b1k
                            + H2 * HIDDEN + HIDDEN        # w2k, b2k
                            + HIDDEN + 2))                # winv_row, c

    grid_spec = pltpu.PrefetchScalarGridSpec(
        num_scalar_prefetch=1,                 # c -> SMEM, lives across the grid
        grid=grid,
        in_specs=[
            # activations: tiled over the batch axis
            pl.BlockSpec((tb, N_X), lambda i, c: (i, 0)),
            pl.BlockSpec((tb, 1), lambda i, c: (i, 0)),
            # weights: constant block index -> fetched once, VMEM-resident
            pl.BlockSpec((N_X, H2), lambda i, c: (0, 0)),
            pl.BlockSpec((1, H2), lambda i, c: (0, 0)),
            pl.BlockSpec((H2, HIDDEN), lambda i, c: (0, 0)),
            pl.BlockSpec((1, HIDDEN), lambda i, c: (0, 0)),
            pl.BlockSpec((1, HIDDEN), lambda i, c: (0, 0)),
        ],
        out_specs=pl.BlockSpec((tb, N_X), lambda i, c: (i, 0)),
    )

    return pl.pallas_call(
        _mech_kernel,
        out_shape=jax.ShapeDtypeStruct((B, N_X), jnp.float32),
        grid_spec=grid_spec,
        compiler_params=pltpu.CompilerParams(
            dimension_semantics=("parallel",)),   # megacore sharding on v7x
        cost_estimate=cost,
    )(c, x1, u1, w1k, b1k, w2k, b2k, winv_row)


def init_params(key, n_x=N_X, hidden=HIDDEN, std=1e-3):
    """Deterministic init matching the module's init_small path
    (normal(0, 0.001) weights, zero biases). Weights are (in, out)."""
    ks = jax.random.split(key, 5)
    w1k = std * jax.random.normal(ks[0], (n_x, 2 * hidden), jnp.float32)
    b1k = jnp.zeros((1, 2 * hidden), jnp.float32)
    w2k = std * jax.random.normal(ks[1], (2 * hidden, hidden), jnp.float32)
    b2k = jnp.zeros((1, hidden), jnp.float32)
    w1b = std * jax.random.normal(ks[2], (1, 2 * hidden), jnp.float32)
    b1b = jnp.zeros((1, 2 * hidden), jnp.float32)
    w2b = std * jax.random.normal(ks[3], (2 * hidden, hidden), jnp.float32)
    b2b = jnp.zeros((1, hidden), jnp.float32)
    winv = std * jax.random.normal(ks[4], (hidden, 1), jnp.float32)
    binv = jnp.zeros((1, 1), jnp.float32)
    return (w1k, b1k, w2k, b2k, w1b, b1b, w2b, b2b, winv, binv)


def reference_forward(x1, u1, params, *, dt=DT):
    """Pure-JAX mirror of the PyTorch module (un-folded)."""
    (w1k, b1k, w2k, b2k, w1b, b1b, w2b, b2b, winv, binv) = params
    h_k = x1 @ w1k + b1k
    h_k = jnp.where(h_k >= 0.0, h_k, 3.0 * h_k)
    out_k = jnp.maximum(h_k @ w2k + b2k, 0.0)
    out_b = (u1 @ w1b + b1b) @ w2b + b2b
    out_inv = (out_k + out_b) @ winv + binv
    dv = out_inv / dt
    return jnp.concatenate([x1[:, 1:2], dv], axis=-1)


if __name__ == "__main__":
    key = jax.random.PRNGKey(0)
    k_param, k_x, k_u = jax.random.split(key, 3)

    B = 16                      # small demo batch; block_b=8 -> 2 grid steps
    params = init_params(k_param)
    x1 = jax.random.normal(k_x, (B, N_X), jnp.float32)
    u1 = jax.random.normal(k_u, (B, 1), jnp.float32)

    prepped = prepare_params(params, dt=DT)
    ref = reference_forward(x1, u1, params, dt=DT)

    # Exercise the multi-tile grid path (weights resident across tiles).
    dx = mechanical_system_forward(x1, u1, prepped, block_b=8)
    dx = jax.block_until_ready(dx)
    assert dx.shape == (B, N_X)
    assert jnp.allclose(dx, ref, atol=1e-5, rtol=1e-5), "mismatch (tiled)"

    # Also the single-tile (default block) path.
    dx_full = mechanical_system_forward(x1, u1, prepped)
    dx_full = jax.block_until_ready(dx_full)
    assert jnp.allclose(dx_full, ref, atol=1e-5, rtol=1e-5), "mismatch (full)"

    print("KERNEL_OK")
</pallas_src>

<mosaic_0001>
module attributes {stable_mosaic.version = 11 : i64} {
  func.func @_mech_kernel(%arg0: i32, %arg1: memref<2xf32, #tpu.memory_space<smem>>, %arg2: memref<8x2xf32, #tpu.memory_space<vmem>>, %arg3: memref<8x1xf32, #tpu.memory_space<vmem>>, %arg4: memref<2x256xf32, #tpu.memory_space<vmem>>, %arg5: memref<1x256xf32, #tpu.memory_space<vmem>>, %arg6: memref<256x128xf32, #tpu.memory_space<vmem>>, %arg7: memref<1x128xf32, #tpu.memory_space<vmem>>, %arg8: memref<1x128xf32, #tpu.memory_space<vmem>>, %arg9: memref<8x2xf32, #tpu.memory_space<vmem>>) attributes {dimension_semantics = [#tpu.dimension_semantics<parallel>], iteration_bounds = array<i64: 2>, scalar_prefetch = 1 : i64, scratch_operands = 0 : i64, tpu.core_type = #tpu.core_type<tc>, window_params = [{transform_indices = @transform_0, window_bounds = array<i64: 8, 2>}, {transform_indices = @transform_1, window_bounds = array<i64: 8, 1>}, {pipeline_mode = #tpu.pipeline_mode<synchronous>, transform_indices = @transform_2, window_bounds = array<i64: 2, 256>}, {pipeline_mode = #tpu.pipeline_mode<synchronous>, transform_indices = @transform_3, window_bounds = array<i64: 1, 256>}, {pipeline_mode = #tpu.pipeline_mode<synchronous>, transform_indices = @transform_4, window_bounds = array<i64: 256, 128>}, {pipeline_mode = #tpu.pipeline_mode<synchronous>, transform_indices = @transform_5, window_bounds = array<i64: 1, 128>}, {pipeline_mode = #tpu.pipeline_mode<synchronous>, transform_indices = @transform_6, window_bounds = array<i64: 1, 128>}, {transform_indices = @transform_7, window_bounds = array<i64: 8, 2>}]} {
    %c0 = arith.constant 0 : index
    %c0_0 = arith.constant 0 : index
    %0 = vector.load %arg2[%c0, %c0_0] : memref<8x2xf32, #tpu.memory_space<vmem>>, vector<8x2xf32>
    %c0_1 = arith.constant 0 : index
    %c0_2 = arith.constant 0 : index
    %1 = vector.load %arg3[%c0_1, %c0_2] : memref<8x1xf32, #tpu.memory_space<vmem>>, vector<8x1xf32>
    %c0_3 = arith.constant 0 : index
    %c0_4 = arith.constant 0 : index
    %2 = vector.load %arg4[%c0_3, %c0_4] : memref<2x256xf32, #tpu.memory_space<vmem>>, vector<2x256xf32>
    %3 = vector.extract_strided_slice %0 {offsets = [0, 0], sizes = [8, 1], strides = [1, 1]} : vector<8x2xf32> to vector<8x1xf32>
    %4 = vector.extract_strided_slice %2 {offsets = [0, 0], sizes = [1, 256], strides = [1, 1]} : vector<2x256xf32> to vector<1x256xf32>
    %5 = vector.broadcast %3 : vector<8x1xf32> to vector<8x256xf32>
    %6 = vector.broadcast %4 : vector<1x256xf32> to vector<8x256xf32>
    %7 = arith.mulf %5, %6 : vector<8x256xf32>
    %8 = vector.extract_strided_slice %0 {offsets = [0, 1], sizes = [8, 1], strides = [1, 1]} : vector<8x2xf32> to vector<8x1xf32>
    %9 = vector.extract_strided_slice %2 {offsets = [1, 0], sizes = [1, 256], strides = [1, 1]} : vector<2x256xf32> to vector<1x256xf32>
    %10 = vector.broadcast %8 : vector<8x1xf32> to vector<8x256xf32>
    %11 = vector.broadcast %9 : vector<1x256xf32> to vector<8x256xf32>
    %12 = arith.mulf %10, %11 : vector<8x256xf32>
    %13 = arith.addf %7, %12 : vector<8x256xf32>
    %c0_5 = arith.constant 0 : index
    %c0_6 = arith.constant 0 : index
    %14 = vector.load %arg5[%c0_5, %c0_6] : memref<1x256xf32, #tpu.memory_space<vmem>>, vector<1x256xf32>
    %15 = vector.broadcast %14 : vector<1x256xf32> to vector<8x256xf32>
    %16 = arith.addf %13, %15 : vector<8x256xf32>
    %cst = arith.constant 0.000000e+00 : f32
    %17 = vector.broadcast %cst : f32 to vector<8x256xf32>
    %18 = arith.cmpf oge, %16, %17 : vector<8x256xf32>
    %cst_7 = arith.constant 3.000000e+00 : f32
    %19 = vector.broadcast %cst_7 : f32 to vector<8x256xf32>
    %20 = arith.mulf %19, %16 : vector<8x256xf32>
    %21 = arith.select %18, %16, %20 : vector<8x256xi1>, vector<8x256xf32>
    %c0_8 = arith.constant 0 : index
    %c0_9 = arith.constant 0 : index
    %22 = vector.load %arg6[%c0_8, %c0_9] : memref<256x128xf32, #tpu.memory_space<vmem>>, vector<256x128xf32>
    %cst_10 = arith.constant dense<0.000000e+00> : vector<8x128xf32>
    %23 = tpu.matmul %21, %22, %cst_10 {dimension_numbers = #tpu.dot_dimension_numbers<[1], [0], [0], [1], [0, 0, 1, 1], [], []>} : vector<8x256xf32>, vector<256x128xf32>, vector<8x128xf32> -> vector<8x128xf32>
    %c0_11 = arith.constant 0 : index
    %c0_12 = arith.constant 0 : index
    %24 = vector.load %arg7[%c0_11, %c0_12] : memref<1x128xf32, #tpu.memory_space<vmem>>, vector<1x128xf32>
    %25 = vector.broadcast %24 : vector<1x128xf32> to vector<8x128xf32>
    %26 = arith.addf %23, %25 : vector<8x128xf32>
    %cst_13 = arith.constant 0.000000e+00 : f32
    %27 = vector.broadcast %cst_13 : f32 to vector<8x128xf32>
    %28 = arith.maximumf %26, %27 : vector<8x128xf32>
    %c0_14 = arith.constant 0 : index
    %c0_15 = arith.constant 0 : index
    %29 = vector.load %arg8[%c0_14, %c0_15] : memref<1x128xf32, #tpu.memory_space<vmem>>, vector<1x128xf32>
    %30 = vector.broadcast %29 : vector<1x128xf32> to vector<8x128xf32>
    %31 = arith.mulf %28, %30 : vector<8x128xf32>
    %cst_16 = arith.constant dense<0.000000e+00> : vector<8xf32>
    %32 = vector.multi_reduction <add>, %31, %cst_16 [1] : vector<8x128xf32> to vector<8xf32>
    %33 = vector.shape_cast %32 : vector<8xf32> to vector<8x1xf32>
    %c0_17 = arith.constant 0 : index
    %34 = memref.load %arg1[%c0_17] : memref<2xf32, #tpu.memory_space<smem>>
    %35 = vector.broadcast %34 : f32 to vector<8x1xf32>
    %36 = arith.mulf %1, %35 : vector<8x1xf32>
    %37 = arith.addf %33, %36 : vector<8x1xf32>
    %c1 = arith.constant 1 : index
    %38 = memref.load %arg1[%c1] : memref<2xf32, #tpu.memory_space<smem>>
    %39 = vector.broadcast %38 : f32 to vector<8x1xf32>
    %40 = arith.addf %37, %39 : vector<8x1xf32>
    %41 = tpu.iota {dimensions = array<i32: 1>} : vector<8x2xi32>
    %c0_i32 = arith.constant 0 : i32
    %42 = vector.broadcast %c0_i32 : i32 to vector<8x2xi32>
    %43 = arith.cmpi eq, %41, %42 : vector<8x2xi32>
    %44 = vector.extract_strided_slice %0 {offsets = [0, 1], sizes = [8, 1], strides = [1, 1]} : vector<8x2xf32> to vector<8x1xf32>
    %45 = vector.shape_cast %44 : vector<8x1xf32> to vector<8x1xf32>
    %46 = vector.broadcast %45 : vector<8x1xf32> to vector<8x2xf32>
    %47 = vector.shape_cast %40 : vector<8x1xf32> to vector<8x1xf32>
    %48 = vector.broadcast %47 : vector<8x1xf32> to vector<8x2xf32>
    %49 = arith.select %43, %46, %48 : vector<8x2xi1>, vector<8x2xf32>
    %c0_18 = arith.constant 0 : index
    %c0_19 = arith.constant 0 : index
    %50 = vector.load %arg9[%c0_18, %c0_19] : memref<8x2xf32, #tpu.memory_space<vmem>>, vector<8x2xf32>
    tpu.vector_store %arg9[%c0_18, %c0_19], %49 {strides = array<i32>} : memref<8x2xf32, #tpu.memory_space<vmem>>, vector<8x2xf32>,
    return
  }
  func.func @transform_0(%arg0: i32, %arg1: memref<2xf32, #tpu.memory_space<smem>>) -> (i32, i32) {
    %c0_i32 = arith.constant 0 : i32
    %c0_i32_0 = arith.constant 0 : i32
    return %arg0, %c0_i32 : i32, i32
  }
  func.func @transform_1(%arg0: i32, %arg1: memref<2xf32, #tpu.memory_space<smem>>) -> (i32, i32) {
    %c0_i32 = arith.constant 0 : i32
    %c0_i32_0 = arith.constant 0 : i32
    return %arg0, %c0_i32 : i32, i32
  }
  func.func @transform_2(%arg0: i32, %arg1: memref<2xf32, #tpu.memory_space<smem>>) -> (i32, i32) {
    %c0_i32 = arith.constant 0 : i32
    %c0_i32_0 = arith.constant 0 : i32
    %c0_i32_1 = arith.constant 0 : i32
    return %c0_i32, %c0_i32_0 : i32, i32
  }
  func.func @transform_3(%arg0: i32, %arg1: memref<2xf32, #tpu.memory_space<smem>>) -> (i32, i32) {
    %c0_i32 = arith.constant 0 : i32
    %c0_i32_0 = arith.constant 0 : i32
    %c0_i32_1 = arith.constant 0 : i32
    return %c0_i32, %c0_i32_0 : i32, i32
  }
  func.func @transform_4(%arg0: i32, %arg1: memref<2xf32, #tpu.memory_space<smem>>) -> (i32, i32) {
    %c0_i32 = arith.constant 0 : i32
    %c0_i32_0 = arith.constant 0 : i32
    %c0_i32_1 = arith.constant 0 : i32
    return %c0_i32, %c0_i32_0 : i32, i32
  }
  func.func @transform_5(%arg0: i32, %arg1: memref<2xf32, #tpu.memory_space<smem>>) -> (i32, i32) {
    %c0_i32 = arith.constant 0 : i32
    %c0_i32_0 = arith.constant 0 : i32
    %c0_i32_1 = arith.constant 0 : i32
    return %c0_i32, %c0_i32_0 : i32, i32
  }
  func.func @transform_6(%arg0: i32, %arg1: memref<2xf32, #tpu.memory_space<smem>>) -> (i32, i32) {
    %c0_i32 = arith.constant 0 : i32
    %c0_i32_0 = arith.constant 0 : i32
    %c0_i32_1 = arith.constant 0 : i32
    return %c0_i32, %c0_i32_0 : i32, i32
  }
  func.func @transform_7(%arg0: i32, %arg1: memref<2xf32, #tpu.memory_space<smem>>) -> (i32, i32) {
    %c0_i32 = arith.constant 0 : i32
    %c0_i32_0 = arith.constant 0 : i32
    return %arg0, %c0_i32 : i32, i32
  }
}

</mosaic_0001>

<llo_original>
// kernel: tpu_custom_call.1
$region0: #{tpu_custom_call.1}
  #allocation0 [shape = 'u32[]', space=smem, size = 0x4, offset = 0x4, fixed_abs, tag = 'smem constant byte address 0x4 - core index']
  #allocation1 [shape = 'u32[144,128]{1,0:T(1,128)}', space=vmem, size = 0x12000, scoped, tag = 'internal scratch']
  #allocation2 [shape = 's32[1]{0}', space=sflag, size = 0x4, scoped, tag = 'scoped memory for tpu_custom_call.1']
  #allocation3 [shape = 'u8[512]{0}', space=smem, size = 0x200, scoped, tag = 'prefetched SMEM operand 0']
  %s0 = inlined_call_operand.vmem [shape: f32[2], index: 0, kind: input, shape index: {}]
  %s1 = inlined_call_operand.vmem [shape: f32[16,2], index: 1, kind: input, shape index: {}]
  %s2 = inlined_call_operand.vmem [shape: f32[16,1], index: 2, kind: input, shape index: {}]
  %s3 = inlined_call_operand.vmem [shape: f32[2,256], index: 3, kind: input, shape index: {}]
  %s4 = inlined_call_operand.vmem [shape: f32[1,256], index: 4, kind: input, shape index: {}]
  %s5 = inlined_call_operand.hbm [shape: f32[256,128], index: 5, kind: input, shape index: {}]
  %s6 = inlined_call_operand.vmem [shape: f32[1,128], index: 6, kind: input, shape index: {}]
  %s7 = inlined_call_operand.vmem [shape: f32[1,128], index: 7, kind: input, shape index: {}]
  %s8 = inlined_call_operand.vmem [shape: f32[16,2], index: 8, kind: output, shape index: {}]
  %s9 = sld [smem:[#allocation0]]
  $region65: #{tpu_custom_call.1} parent=0
    _
  %s11 = ssub.s32 1, %s9
  %s12 = scalar_select 0, %s11, %s9
  %s13 = sshll.u32 %s0, 4
  %s14 = int_to_ptr.vmem [resolvable:$true] %s13
  %16 = dma.vmem_to_smem %s14, 16, [#allocation3], [#allocation2]
  %17 = dma.done [#allocation2], 16
  %18 = sfence
  $region1: #{tpu_custom_call.1} parent=0
    #allocation4 [shape = 'u8[131072]{0}', space=vmem, size = 0x20000, scoped, tag = 'input window, operand 5, single buffered']
    #allocation5 [shape = 's32[2]{0}', space=sflag, size = 0x8, scoped, tag = 'scoped memory for tpu_custom_call.1']
    %19 = vsyncpa [#allocation5], 0
    loop: start=0, step=1, limit=4
    $region2: #{tpu_custom_call.1} parent=1 // loop_pre_header
      _
    $region3: #{tpu_custom_call.1} parent=1 // loop_header
      %s21 = sphi 0, %s25
      %p22 = scmp.ge.s32.totalorder %s21, 4
      %s31 = sphi 0, %s33
      %s34 = sphi 0, %s31
      %s35 = sphi 0, %s34
      %s51 = sphi 0, %s35
      %s57 = sphi 0, %s59
      %s60 = sphi 0, %s57
      %s61 = sphi 0, %s60
      %s77 = sphi 0, %s61
      %s81 = sphi 0, %s81
      %s83 = sphi 0, %s81
      %s84 = sphi 0, %s83
      %s98 = sphi 0, %s84
      %s102 = sphi 0, %s102
      %s104 = sphi 0, %s102
      %s105 = sphi 0, %s104
      %s119 = sphi 0, %s105
      %s123 = sphi 0, %s123
      %s125 = sphi 0, %s123
      %s126 = sphi 0, %s125
      %s140 = sphi 0, %s126
      %s144 = sphi 0, %s144
      %s146 = sphi 0, %s144
      %s147 = sphi 0, %s146
      %s161 = sphi 0, %s147
      %s165 = sphi 0, %s165
      %s167 = sphi 0, %s165
      %s168 = sphi 0, %s167
      %s182 = sphi 0, %s168
      %s188 = sphi 0, %s190
      %s191 = sphi 0, %s188
      %s192 = sphi 0, %s191
      %s208 = sphi 0, %s192
    $region4: #{tpu_custom_call.1} parent=1 // loop_header_branch
      %24 = sbr.rel (%p22) target = $region8
    $region5: #{tpu_custom_call.1} parent=1 // loop_body
      %s26 = ssub.s32 %s21, 1
      %s27 = ssub.s32 %s21, 2
      %s28 = sadd.s32 %s21, 1
      %s29 = ssub.s32 %s21, %s28
      %p30 = scmp.eq.s32.totalorder %s29, 0
      %s32 = sadd.s32 %s31, 1
      %s33 = scalar_select %p30, %s31, %s32
      %p36 = pneg %p30
      %p37 = scmp.eq.s32.totalorder %s21, 1
      %p38 = por %p36, %p37
      %p39 = scmp.ne.s32.totalorder %s31, %s34
      %p40 = scmp.eq.s32.totalorder %s21, 0
      %p41 = por %p39, %p40
      %p42 = scmp.ne.s32.totalorder %s31, %s34
      %p43 = scmp.eq.s32.totalorder %s26, 1
      %p44 = por %p42, %p43
      %p45 = scmp.ne.s32.totalorder %s34, %s35
      %p46 = scmp.eq.s32.totalorder %s26, 0
      %p47 = por %p45, %p46
      %p48 = scmp.ne.s32.totalorder %s34, %s35
      %p49 = scmp.eq.s32.totalorder %s27, 1
      %p50 = por %p48, %p49
      %p52 = scmp.ne.s32.totalorder %s35, %s51
      %p53 = scmp.eq.s32.totalorder %s27, 0
      %p54 = por %p52, %p53
      %s55 = ssub.s32 %s21, %s28
      %p56 = scmp.eq.s32.totalorder %s55, 0
      %s58 = sadd.s32 %s57, 1
      %s59 = scalar_select %p56, %s57, %s58
      %p62 = pneg %p56
      %p63 = scmp.eq.s32.totalorder %s21, 1
      %p64 = por %p62, %p63
      %p65 = scmp.ne.s32.totalorder %s57, %s60
      %p66 = scmp.eq.s32.totalorder %s21, 0
      %p67 = por %p65, %p66
      %p68 = scmp.ne.s32.totalorder %s57, %s60
      %p69 = scmp.eq.s32.totalorder %s26, 1
      %p70 = por %p68, %p69
      %p71 = scmp.ne.s32.totalorder %s60, %s61
      %p72 = scmp.eq.s32.totalorder %s26, 0
      %p73 = por %p71, %p72
      %p74 = scmp.ne.s32.totalorder %s60, %s61
      %p75 = scmp.eq.s32.totalorder %s27, 1
      %p76 = por %p74, %p75
      %p78 = scmp.ne.s32.totalorder %s61, %s77
      %p79 = scmp.eq.s32.totalorder %s27, 0
      %p80 = por %p78, %p79
      %s82 = sadd.s32 %s81, 1
      %p85 = scmp.eq.s32.totalorder %s21, 1
      %p86 = scmp.ne.s32.totalorder %s81, %s83
      %p87 = scmp.eq.s32.totalorder %s21, 0
      %p88 = por %p86, %p87
      %p89 = scmp.ne.s32.totalorder %s81, %s83
      %p90 = scmp.eq.s32.totalorder %s26, 1
      %p91 = por %p89, %p90
      %p92 = scmp.ne.s32.totalorder %s83, %s84
      %p93 = scmp.eq.s32.totalorder %s26, 0
      %p94 = por %p92, %p93
      %p95 = scmp.ne.s32.totalorder %s83, %s84
      %p96 = scmp.eq.s32.totalorder %s27, 1
      %p97 = por %p95, %p96
      %p99 = scmp.ne.s32.totalorder %s84, %s98
      %p100 = scmp.eq.s32.totalorder %s27, 0
      %p101 = por %p99, %p100
      %s103 = sadd.s32 %s102, 1
      %p106 = scmp.eq.s32.totalorder %s21, 1
      %p107 = scmp.ne.s32.totalorder %s102, %s104
      %p108 = scmp.eq.s32.totalorder %s21, 0
      %p109 = por %p107, %p108
      %p110 = scmp.ne.s32.totalorder %s102, %s104
      %p111 = scmp.eq.s32.totalorder %s26, 1
      %p112 = por %p110, %p111
      %p113 = scmp.ne.s32.totalorder %s104, %s105
      %p114 = scmp.eq.s32.totalorder %s26, 0
      %p115 = por %p113, %p114
      %p116 = scmp.ne.s32.totalorder %s104, %s105
      %p117 = scmp.eq.s32.totalorder %s27, 1
      %p118 = por %p116, %p117
      %p120 = scmp.ne.s32.totalorder %s105, %s119
      %p121 = scmp.eq.s32.totalorder %s27, 0
      %p122 = por %p120, %p121
      %s124 = sadd.s32 %s123, 1
      %p127 = scmp.eq.s32.totalorder %s21, 1
      %p128 = scmp.ne.s32.totalorder %s123, %s125
      %p129 = scmp.eq.s32.totalorder %s21, 0
      %p130 = por %p128, %p129
      %p131 = scmp.ne.s32.totalorder %s123, %s125
      %p132 = scmp.eq.s32.totalorder %s26, 1
      %p133 = por %p131, %p132
      %p134 = scmp.ne.s32.totalorder %s125, %s126
      %p135 = scmp.eq.s32.totalorder %s26, 0
      %p136 = por %p134, %p135
      %p137 = scmp.ne.s32.totalorder %s125, %s126
      %p138 = scmp.eq.s32.totalorder %s27, 1
      %p139 = por %p137, %p138
      %p141 = scmp.ne.s32.totalorder %s126, %s140
      %p142 = scmp.eq.s32.totalorder %s27, 0
      %p143 = por %p141, %p142
      %s145 = sadd.s32 %s144, 1
      %p148 = scmp.eq.s32.totalorder %s21, 1
      %p149 = scmp.ne.s32.totalorder %s144, %s146
      %p150 = scmp.eq.s32.totalorder %s21, 0
      %p151 = por %p149, %p150
      %p152 = scmp.ne.s32.totalorder %s144, %s146
      %p153 = scmp.eq.s32.totalorder %s26, 1
      %p154 = por %p152, %p153
      %p155 = scmp.ne.s32.totalorder %s146, %s147
      %p156 = scmp.eq.s32.totalorder %s26, 0
      %p157 = por %p155, %p156
      %p158 = scmp.ne.s32.totalorder %s146, %s147
      %p159 = scmp.eq.s32.totalorder %s27, 1
      %p160 = por %p158, %p159
      %p162 = scmp.ne.s32.totalorder %s147, %s161
      %p163 = scmp.eq.s32.totalorder %s27, 0
      %p164 = por %p162, %p163
      %s166 = sadd.s32 %s165, 1
      %p169 = scmp.eq.s32.totalorder %s21, 1
      %p170 = scmp.ne.s32.totalorder %s165, %s167
      %p171 = scmp.eq.s32.totalorder %s21, 0
      %p172 = por %p170, %p171
      %p173 = scmp.ne.s32.totalorder %s165, %s167
      %p174 = scmp.eq.s32.totalorder %s26, 1
      %p175 = por %p173, %p174
      %p176 = scmp.ne.s32.totalorder %s167, %s168
      %p177 = scmp.eq.s32.totalorder %s26, 0
      %p178 = por %p176, %p177
      %p179 = scmp.ne.s32.totalorder %s167, %s168
      %p180 = scmp.eq.s32.totalorder %s27, 1
      %p181 = por %p179, %p180
      %p183 = scmp.ne.s32.totalorder %s168, %s182
      %p184 = scmp.eq.s32.totalorder %s27, 0
      %p185 = por %p183, %p184
      %s186 = ssub.s32 %s21, %s28
      %p187 = scmp.eq.s32.totalorder %s186, 0
      %s189 = sadd.s32 %s188, 1
      %s190 = scalar_select %p187, %s188, %s189
      %p193 = pneg %p187
      %p194 = scmp.eq.s32.totalorder %s21, 1
      %p195 = por %p193, %p194
      %p196 = scmp.ne.s32.totalorder %s188, %s191
      %p197 = scmp.eq.s32.totalorder %s21, 0
      %p198 = por %p196, %p197
      %p199 = scmp.ne.s32.totalorder %s188, %s191
      %p200 = scmp.eq.s32.totalorder %s26, 1
      %p201 = por %p199, %p200
      %p202 = scmp.ne.s32.totalorder %s191, %s192
      %p203 = scmp.eq.s32.totalorder %s26, 0
      %p204 = por %p202, %p203
      %p205 = scmp.ne.s32.totalorder %s191, %s192
      %p206 = scmp.eq.s32.totalorder %s27, 1
      %p207 = por %p205, %p206
      %p209 = scmp.ne.s32.totalorder %s192, %s208
      %p210 = scmp.eq.s32.totalorder %s27, 0
      %p211 = por %p209, %p210
      %p212 = scmp.le.s32.totalorder 1, %s21
      %p213 = scmp.lt.s32.totalorder %s21, 3
      %p214 = pnand %p212, %p213
      %p215 = pneg %p214
      // Predicated region
      $region9: #{tpu_custom_call.1} parent=5 // pred_check
        _
      $region10: #{tpu_custom_call.1} parent=5 // pred_check_branch
        %217 = sbr.rel (%p214) target = $region12
      $region11: #{tpu_custom_call.1} parent=5 // pred_region
        %s218 = ssub.s32 %s21, 1
        // Predicated region
        $region13: #{tpu_custom_call.1} parent=11 // pred_check
          %p219 = pneg %p94
        $region14: #{tpu_custom_call.1} parent=11 // pred_check_branch
          %221 = sbr.rel (%p219) target = $region16
        $region15: #{tpu_custom_call.1} parent=11 // pred_region
          _
        $region16: #{tpu_custom_call.1} parent=11 // pred_fallthru
          _
        // Predicated region
        $region17: #{tpu_custom_call.1} parent=11 // pred_check
          %p222 = pneg %p115
        $region18: #{tpu_custom_call.1} parent=11 // pred_check_branch
          %224 = sbr.rel (%p222) target = $region20
        $region19: #{tpu_custom_call.1} parent=11 // pred_region
          _
        $region20: #{tpu_custom_call.1} parent=11 // pred_fallthru
          _
        // Predicated region
        $region21: #{tpu_custom_call.1} parent=11 // pred_check
          %p225 = pneg %p136
        $region22: #{tpu_custom_call.1} parent=11 // pred_check_branch
          %227 = sbr.rel (%p225) target = $region24
        $region23: #{tpu_custom_call.1} parent=11 // pred_region
          %s229 = ssub.s32 4096, 4096
          %230 = vsyncadd [#allocation5], %s229
          %s231 = sshll.u32 [#allocation4], 4
          %s232 = int_to_ptr.vmem [resolvable:$true] %s231
          %237 = dma.hbm_to_vmem [thread:$0]  %s5, 4096, %s232, [#allocation5], 128, 128, 8
        $region24: #{tpu_custom_call.1} parent=11 // pred_fallthru
          _
        // Predicated region
        $region25: #{tpu_custom_call.1} parent=11 // pred_check
          %p238 = pneg %p157
        $region26: #{tpu_custom_call.1} parent=11 // pred_check_branch
          %240 = sbr.rel (%p238) target = $region28
        $region27: #{tpu_custom_call.1} parent=11 // pred_region
          _
        $region28: #{tpu_custom_call.1} parent=11 // pred_fallthru
          _
        // Predicated region
        $region29: #{tpu_custom_call.1} parent=11 // pred_check
          %p241 = pneg %p178
        $region30: #{tpu_custom_call.1} parent=11 // pred_check_branch
          %243 = sbr.rel (%p241) target = $region32
        $region31: #{tpu_custom_call.1} parent=11 // pred_region
          _
        $region32: #{tpu_custom_call.1} parent=11 // pred_fallthru
          _
      $region12: #{tpu_custom_call.1} parent=5 // pred_fallthru
        _
      %p244 = scmp.lt.s32.totalorder %s21, 2
      // Predicated region
      $region33: #{tpu_custom_call.1} parent=5 // pred_check
        %p245 = pneg %p244
      $region34: #{tpu_custom_call.1} parent=5 // pred_check_branch
        %247 = sbr.rel (%p245) target = $region36
      $region35: #{tpu_custom_call.1} parent=5 // pred_region
        // Predicated region
        $region37: #{tpu_custom_call.1} parent=35 // pred_check
          %p248 = pneg %p41
        $region38: #{tpu_custom_call.1} parent=35 // pred_check_branch
          %250 = sbr.rel (%p248) target = $region40
        $region39: #{tpu_custom_call.1} parent=35 // pred_region
          %p251 = scmp.lt.s32.totalorder %s21, 1
          %s252 = scalar_select %p251, %s21, 1
          %s253 = smul.addr %s252, 8
          %s254 = scalar_lea.vmem %s1, %s253
        $region40: #{tpu_custom_call.1} parent=35 // pred_fallthru
          _
        // Predicated region
        $region41: #{tpu_custom_call.1} parent=35 // pred_check
          %p255 = pneg %p67
        $region42: #{tpu_custom_call.1} parent=35 // pred_check_branch
          %257 = sbr.rel (%p255) target = $region44
        $region43: #{tpu_custom_call.1} parent=35 // pred_region
          %p258 = scmp.lt.s32.totalorder %s21, 1
          %s259 = scalar_select %p258, %s21, 1
          %s260 = smul.addr %s259, 8
          %s261 = scalar_lea.vmem %s2, %s260
        $region44: #{tpu_custom_call.1} parent=35 // pred_fallthru
          _
      $region36: #{tpu_custom_call.1} parent=5 // pred_fallthru
        _
      %p262 = scmp.le.s32.totalorder 1, %s21
      %p263 = scmp.lt.s32.totalorder %s21, 3
      %p264 = pnand %p262, %p263
      %p265 = pneg %p264
      // Predicated region
      $region45: #{tpu_custom_call.1} parent=5 // pred_check
        _
      $region46: #{tpu_custom_call.1} parent=5 // pred_check_branch
        %267 = sbr.rel (%p264) target = $region48
      $region47: #{tpu_custom_call.1} parent=5 // pred_region
        %s268 = ssub.s32 %s21, 1
        // Predicated region
        $region49: #{tpu_custom_call.1} parent=47 // pred_check
          %p269 = pneg %p136
        $region50: #{tpu_custom_call.1} parent=47 // pred_check_branch
          %271 = sbr.rel (%p269) target = $region52
        $region51: #{tpu_custom_call.1} parent=47 // pred_region
          %272 = dma.done [#allocation5], 4096
        $region52: #{tpu_custom_call.1} parent=47 // pred_fallthru
          _
        %p273 = scmp.lt.s32.totalorder %s26, 1
        %s274 = scalar_select %p273, %s26, 1
        %s275 = smul.addr %s274, 8
        %s276 = scalar_lea.vmem %s1, %s275
        %p277 = pneg %p47
        %p278 = pneg %p44
        %p279 = scmp.lt.s32.totalorder %s26, 1
        %s280 = scalar_select %p279, %s26, 1
        %s281 = smul.addr %s280, 8
        %s282 = scalar_lea.vmem %s2, %s281
        %p283 = pneg %p73
        %p284 = pneg %p70
        %p285 = pneg %p94
        %p286 = pneg %p91
        %p287 = pneg %p115
        %p288 = pneg %p112
        %p289 = pneg %p136
        %p290 = pneg %p133
        %p291 = pneg %p157
        %p292 = pneg %p154
        %p293 = pneg %p178
        %p294 = pneg %p175
        %p295 = pneg %p204
        %p296 = pneg %p201
        %p297 = scmp.lt.s32.totalorder %s26, 1
        %s298 = scalar_select %p297, %s26, 1
        %s299 = smul.addr %s298, 8
        %s300 = scalar_lea.vmem %s8, %s299
        %p301 = scmp.lt.s32.totalorder %s26, 1
        %s302 = scalar_select %p301, %s26, 1
        %s303 = smul.addr %s302, 8
        %s304 = scalar_lea.vmem %s1, %s303
        %p305 = scmp.lt.s32.totalorder %s26, 1
        %s306 = scalar_select %p305, %s26, 1
        %s307 = smul.addr %s306, 8
        %s308 = scalar_lea.vmem %s2, %s307
        %p309 = scmp.lt.s32.totalorder %s26, 1
        %s310 = scalar_select %p309, %s26, 1
        %s311 = smul.addr %s310, 8
        %s312 = scalar_lea.vmem %s8, %s311
        %v313 = vld [vmem:[%s304] sm:$0xff]
        %v314 = vld [vmem:[%s308] sm:$0xff]
        %v315 = vld [vmem:[%s3] sm:$0xf]
        %317 = vset.pattern.permute.xlu0 0
        %318 = vperm.xlu0 %317, %v313
        %v319 = vpop.permute.xlu0 %318
        %v322 = vlaneseq
        %v323 = vshrl.u32 %v322, 7
        %v324 = vsub.s32 0, %v323
        %v325 = vrot.slane %v315, %v324
        %v326 = vlaneseq
        %v327 = vshrl.u32 %v326, 7
        %v328 = vsub.s32 2, %v327
        %v329 = vrot.slane %v315, %v328
        %v332 = vlaneseq
        %v333 = vshrl.u32 %v332, 7
        %v334 = vsub.s32 0, %v333
        %v335 = vrot.slane %v325, %v334
        %v336 = vlaneseq
        %v337 = vshrl.u32 %v336, 7
        %v338 = vsub.s32 0, %v337
        %v339 = vrot.slane %v329, %v338
        %v340 = vmul.f32 %v319, %v335
        %v341 = vmul.f32 %v319, %v339
        %342 = vset.pattern.permute.xlu0 1
        %343 = vperm.xlu0 %342, %v313
        %v344 = vpop.permute.xlu0 %343
        %v346 = vlaneseq
        %v347 = vshrl.u32 %v346, 7
        %v348 = vsub.s32 1, %v347
        %v349 = vrot.slane %v315, %v348
        %v350 = vlaneseq
        %v351 = vshrl.u32 %v350, 7
        %v352 = vsub.s32 3, %v351
        %v353 = vrot.slane %v315, %v352
        %v356 = vlaneseq
        %v357 = vshrl.u32 %v356, 7
        %v358 = vsub.s32 1, %v357
        %v359 = vrot.slane %v349, %v358
        %v360 = vlaneseq
        %v361 = vshrl.u32 %v360, 7
        %v362 = vsub.s32 1, %v361
        %v363 = vrot.slane %v353, %v362
        %v364 = vmul.f32 %v344, %v359
        %v365 = vmul.f32 %v344, %v363
        %v366 = vadd.f32 %v340, %v364
        %v367 = vadd.f32 %v341, %v365
        %v368 = vld [vmem:[%s4] sm:$0x3]
        %v370 = vlaneseq
        %v371 = vshrl.u32 %v370, 7
        %v372 = vsub.s32 0, %v371
        %v373 = vrot.slane %v368, %v372
        %v374 = vlaneseq
        %v375 = vshrl.u32 %v374, 7
        %v376 = vsub.s32 1, %v375
        %v377 = vrot.slane %v368, %v376
        %v380 = vadd.f32 %v366, %v373
        %v381 = vadd.f32 %v367, %v377
        %vm382 = vcmp.ge.f32.partialorder %v380, 0.0
        %vm383 = vcmp.ge.f32.partialorder %v381, 0.0
        %v384 = vmul.f32 %v380, 3.0
        %v385 = vmul.f32 %v381, 3.0
        %v386 = vsel %vm382, %v380, %v384
        %v387 = vsel %vm383, %v381, %v385
        %v388 = vld [vmem:[#allocation4] sm:$0xff]
        %v389 = vld [vmem:[#allocation4 + $0x8] sm:$0xff]
        %v390 = vld [vmem:[#allocation4 + $0x10] sm:$0xff]
        %v391 = vld [vmem:[#allocation4 + $0x18] sm:$0xff]
        %v392 = vld [vmem:[#allocation4 + $0x20] sm:$0xff]
        %v393 = vld [vmem:[#allocation4 + $0x28] sm:$0xff]
        %v394 = vld [vmem:[#allocation4 + $0x30] sm:$0xff]
        %v395 = vld [vmem:[#allocation4 + $0x38] sm:$0xff]
        %v396 = vld [vmem:[#allocation4 + $0x40] sm:$0xff]
        %v397 = vld [vmem:[#allocation4 + $0x48] sm:$0xff]
        %v398 = vld [vmem:[#allocation4 + $0x50] sm:$0xff]
        %v399 = vld [vmem:[#allocation4 + $0x58] sm:$0xff]
        %v400 = vld [vmem:[#allocation4 + $0x60] sm:$0xff]
        %v401 = vld [vmem:[#allocation4 + $0x68] sm:$0xff]
        %v402 = vld [vmem:[#allocation4 + $0x70] sm:$0xff]
        %v403 = vld [vmem:[#allocation4 + $0x78] sm:$0xff]
        %v404 = vld [vmem:[#allocation4 + $0x80] sm:$0xff]
        %v405 = vld [vmem:[#allocation4 + $0x88] sm:$0xff]
        %v406 = vld [vmem:[#allocation4 + $0x90] sm:$0xff]
        %v407 = vld [vmem:[#allocation4 + $0x98] sm:$0xff]
        %v408 = vld [vmem:[#allocation4 + $0xa0] sm:$0xff]
        %v409 = vld [vmem:[#allocation4 + $0xa8] sm:$0xff]
        %v410 = vld [vmem:[#allocation4 + $0xb0] sm:$0xff]
        %v411 = vld [vmem:[#allocation4 + $0xb8] sm:$0xff]
        %v412 = vld [vmem:[#allocation4 + $0xc0] sm:$0xff]
        %v413 = vld [vmem:[#allocation4 + $0xc8] sm:$0xff]
        %v414 = vld [vmem:[#allocation4 + $0xd0] sm:$0xff]
        %v415 = vld [vmem:[#allocation4 + $0xd8] sm:$0xff]
        %v416 = vld [vmem:[#allocation4 + $0xe0] sm:$0xff]
        %v417 = vld [vmem:[#allocation4 + $0xe8] sm:$0xff]
        %v418 = vld [vmem:[#allocation4 + $0xf0] sm:$0xff]
        %v419 = vld [vmem:[#allocation4 + $0xf8] sm:$0xff]
        %v420 = vld [vmem:[%s6] sm:$0x1]
        %v422 = vlaneseq
        %v423 = vshrl.u32 %v422, 7
        %v424 = vsub.s32 0, %v423
        %v425 = vrot.slane %v420, %v424
        %427 = vmatprep.subr.mxu0 0.0
        %428 = vmatpush1.msra.mxu0 %v388
        %429 = vmatprep.subr.mxu0 0.0
        %430 = vmatpush1.msra.mxu0 %v389
        %431 = vmatprep.subr.mxu0 0.0
        %432 = vmatpush1.msra.mxu0 %v390
        %433 = vmatprep.subr.mxu0 0.0
        %434 = vmatpush1.msra.mxu0 %v391
        %435 = vmatprep.subr.mxu0 0.0
        %436 = vmatpush1.msra.mxu0 %v392
        %437 = vmatprep.subr.mxu0 0.0
        %438 = vmatpush1.msra.mxu0 %v393
        %439 = vmatprep.subr.mxu0 0.0
        %440 = vmatpush1.msra.mxu0 %v394
        %441 = vmatprep.subr.mxu0 0.0
        %442 = vmatpush1.msra.mxu0 %v395
        %443 = vmatprep.subr.mxu0 0.0
        %444 = vmatpush1.msra.mxu0 %v396
        %445 = vmatprep.subr.mxu0 0.0
        %446 = vmatpush1.msra.mxu0 %v397
        %447 = vmatprep.subr.mxu0 0.0
        %448 = vmatpush1.msra.mxu0 %v398
        %449 = vmatprep.subr.mxu0 0.0
        %450 = vmatpush1.msra.mxu0 %v399
        %451 = vmatprep.subr.mxu0 0.0
        %452 = vmatpush1.msra.mxu0 %v400
        %453 = vmatprep.subr.mxu0 0.0
        %454 = vmatpush1.msra.mxu0 %v401
        %455 = vmatprep.subr.mxu0 0.0
        %456 = vmatpush1.msra.mxu0 %v402
        %457 = vmatprep.subr.mxu0 0.0
        %458 = vmatpush1.msra.mxu0 %v403
        %459 = vmatprep.subr.mxu0 0.0
        %460 = vmatpush1.msra.mxu0 %v404
        %461 = vmatprep.subr.mxu0 0.0
        %462 = vmatpush1.msra.mxu0 %v405
        %463 = vmatprep.subr.mxu0 0.0
        %464 = vmatpush1.msra.mxu0 %v406
        %465 = vmatprep.subr.mxu0 0.0
        %466 = vmatpush1.msra.mxu0 %v407
        %467 = vmatprep.subr.mxu0 0.0
        %468 = vmatpush1.msra.mxu0 %v408
        %469 = vmatprep.subr.mxu0 0.0
        %470 = vmatpush1.msra.mxu0 %v409
        %471 = vmatprep.subr.mxu0 0.0
        %472 = vmatpush1.msra.mxu0 %v410
        %473 = vmatprep.subr.mxu0 0.0
        %474 = vmatpush1.msra.mxu0 %v411
        %475 = vmatprep.subr.mxu0 0.0
        %476 = vmatpush1.msra.mxu0 %v412
        %477 = vmatprep.subr.mxu0 0.0
        %478 = vmatpush1.msra.mxu0 %v413
        %479 = vmatprep.subr.mxu0 0.0
        %480 = vmatpush1.msra.mxu0 %v414
        %481 = vmatprep.subr.mxu0 0.0
        %482 = vmatpush1.msra.mxu0 %v415
        %483 = vmatprep.subr.mxu0 0.0
        %484 = vmatpush1.msra.mxu0 %v416
        %485 = vmatprep.subr.mxu0 0.0
        %486 = vmatpush1.msra.mxu0 %v417
        %487 = vmatprep.subr.mxu0 0.0
        %488 = vmatpush1.msra.mxu0 %v418
        %489 = vmatprep.subr.mxu0 0.0
        %490 = vmatpush1.msra.mxu0 %v419
        %491 = vmatprep.mubr.f32.mxu0 %v387
        %492 = vmatmul.mubr.f32.gmra.mrb[0].mxu0 %v386
        %v493 = vpop.f32.mrb[0].mxu0
        %v494 = vadd.f32 %v425, %v493
        %v495 = vpop.f32.mrb[0].mxu0
        %496 = vdwg.mxu0
        %v497 = vmax.f32 %v494, 0.0
        %v498 = vld [vmem:[%s7] sm:$0x1]
        %v500 = vlaneseq
        %v501 = vshrl.u32 %v500, 7
        %v502 = vsub.s32 0, %v501
        %v503 = vrot.slane %v498, %v502
        %v505 = vmul.f32 %v497, %v503
        %506 = vadd.xlane.f32.xlu0 %v505
        %v507 = vpop.xlane.xlu0 %506
        %s508 = sld [smem:[#allocation3]]
        %v509 = vstv %s508
        %v510 = vmul.f32 %v314, %v509
        %v511 = vadd.f32 %v507, %v510
        %s512 = sld [smem:[#allocation3 + $0x1]]
        %v513 = vstv %s512
        %v514 = vadd.f32 %v511, %v513
        %v515 = vlaneseq
        %v516 = vand.u32 %v515, 127
        %vm517 = vcmp.eq.s32.totalorder %v516, 0
        %519 = vset.pattern.permute.xlu0 0
        %520 = vperm.xlu0 %519, %v514
        %v521 = vpop.permute.xlu0 %520
        %v523 = vsel %vm517, %v344, %v521
        %vm524 = vcmask 15360
        %525 = vst.msk [vmem:[%s312] sm:$0xff] %vm524, %v523
        %p526 = scmp.lt.s32.totalorder %s26, 1
        %s527 = scalar_select %p526, %s26, 1
        %s528 = smul.addr %s527, 8
        %s529 = scalar_lea.vmem %s8, %s528
        // Predicated region
        $region53: #{tpu_custom_call.1} parent=47 // pred_check
          %p530 = pneg %p201
        $region54: #{tpu_custom_call.1} parent=47 // pred_check_branch
          %532 = sbr.rel (%p530) target = $region56
        $region55: #{tpu_custom_call.1} parent=47 // pred_region
          _
        $region56: #{tpu_custom_call.1} parent=47 // pred_fallthru
          _
      $region48: #{tpu_custom_call.1} parent=5 // pred_fallthru
        _
      %p533 = scmp.le.s32.totalorder 2, %s21
      // Predicated region
      $region57: #{tpu_custom_call.1} parent=5 // pred_check
        %p534 = pneg %p533
      $region58: #{tpu_custom_call.1} parent=5 // pred_check_branch
        %536 = sbr.rel (%p534) target = $region60
      $region59: #{tpu_custom_call.1} parent=5 // pred_region
        %s537 = ssub.s32 %s21, 2
        // Predicated region
        $region61: #{tpu_custom_call.1} parent=59 // pred_check
          %p538 = pneg %p207
        $region62: #{tpu_custom_call.1} parent=59 // pred_check_branch
          %540 = sbr.rel (%p538) target = $region64
        $region63: #{tpu_custom_call.1} parent=59 // pred_region
          %p541 = scmp.lt.s32.totalorder %s27, 1
          %s542 = scalar_select %p541, %s27, 1
          %s543 = smul.addr %s542, 8
          %s544 = scalar_lea.vmem %s8, %s543
        $region64: #{tpu_custom_call.1} parent=59 // pred_fallthru
          _
      $region60: #{tpu_custom_call.1} parent=5 // pred_fallthru
        _
    $region6: #{tpu_custom_call.1} parent=1 // loop_footer
      %s25 = sadd.s32 1, %s21
    $region7: #{tpu_custom_call.1} parent=1 // loop_footer_branch
      %20 = sbr.rel target = $region3
    $region8: #{tpu_custom_call.1} parent=1 // loop_exit
      _
    %545 = vsyncpa [#allocation5], 1
    %s546 = scalar_lea.sflag [#allocation5], 1
    %547 = vsyncpa %s546, 1

</llo_original>
